<compile_context>
chip_gen: v5e
topology: v5e:2x2
jax: 0.10.0
libtpu: 0.0.40
codegen_flags: <defaults>
</compile_context>

<pallas_src>
import functools

import jax
import jax.numpy as jnp
from jax.experimental import pallas as pl
from jax.experimental.pallas import tpu as pltpu


# ---------------------------------------------------------------------------
# helpers
# ---------------------------------------------------------------------------

def _vmem_capacity_bytes():
    """Physical per-core VMEM (falls back to the smallest current part, v7x)."""
    try:
        info = pltpu.get_tpu_info()
        cap = getattr(info, "vmem_capacity_bytes", None)
        if cap:
            return int(cap)
    except Exception:
        pass
    return 64 * 1024 * 1024


def _pick_tiles(B, C, T, itemsize, extra_bytes_per_elem, ws_budget):
    """Choose (tile_B, tile_T) for (tile_B, C, tile_T) blocks.

    Targets ~2 MiB of x per grid step (HBM-roofline territory on v5e/v6e),
    capped by `ws_budget` (per-generation VMEM working-set budget), and keeps
    the parallel grid >= 2 steps whenever possible (v7x has 2 TensorCores).
    tile_T is either a multiple of 128 or exactly T (Mosaic block constraint).
    """
    # per-element block bytes: x + out, double-buffered, (+ ext bits) + f32 temps
    bpe = 2 * (2 * itemsize + extra_bytes_per_elem) + 12
    max_elems = max(C * 128, ws_budget // bpe)
    max_cols = max(128, max_elems // C)            # budget for tile_B * tile_T columns

    if T <= max_cols:
        tile_t = T                                  # full T (== full dim, always legal)
    else:
        tile_t = max(128, (max_cols // 128) * 128)  # big multiple of 128

    if tile_t == T:
        # fold batch toward ~2 MiB of x per step, within VMEM, dividing B
        target_cols = max(T, (2 * 1024 * 1024) // max(1, C * itemsize))
        tile_b = min(B, max(1, max_cols // T), max(1, target_cols // T))
    else:
        tile_b = 1
    while B % tile_b:
        tile_b -= 1

    def steps(tb, tt):
        return (B // tb) * ((T + tt - 1) // tt)

    if steps(tile_b, tile_t) < 2:                   # keep both v7x TCs busy if we can
        if tile_b > 1:
            tile_b = max(1, tile_b // 2)
            while B % tile_b:
                tile_b -= 1
        elif T > 128 and tile_t > 128:
            tile_t = max(128, ((tile_t // 2) // 128) * 128)
    return tile_b, tile_t


_ERF_A1 = 0.254829592
_ERF_A2 = -0.284496736
_ERF_A3 = 1.421413741
_ERF_A4 = -1.453152027
_ERF_A5 = 1.061405429
_ERF_P = 0.3275911


def _erf_f32(z):
    """Abramowitz & Stegun 7.1.26 erf approximation (|err| ~ 1e-5 or better here).

    The 1/(1 + p*|z|) uses the EUP approximate reciprocal plus one Newton step
    instead of a VALU divide (v7x is VALU-bound for this kernel; the exp also
    runs on the EUP slot).
    """
    sgn = jnp.where(z < 0.0, -1.0, 1.0)
    az = jnp.abs(z)
    d = 1.0 + _ERF_P * az
    t = pl.reciprocal(d, approx=True)
    t = t * (2.0 - d * t)                           # Newton step -> ~f32-exact 1/d
    poly = ((((_ERF_A5 * t + _ERF_A4) * t + _ERF_A3) * t + _ERF_A2) * t + _ERF_A1) * t
    return sgn * (1.0 - poly * jnp.exp(-az * az))


# ---------------------------------------------------------------------------
# kernel
# ---------------------------------------------------------------------------

def _act_drop_norm_kernel(*refs, eps, threshold, half_scale, use_hw_prng,
                          use_ext_bits, use_dropout, transpose_out):
    # Ref layout (flags decide which optional refs are present):
    #   [seed_smem?]  x (tB,C,tT)  gamma (C,1)  beta (C,1)  [bits (tB,C,tT)?]  out
    i = 0
    seed_ref = None
    if use_hw_prng:
        seed_ref = refs[i]; i += 1
    x_ref, g_ref, b_ref = refs[i], refs[i + 1], refs[i + 2]; i += 3
    bits_ref = None
    if use_ext_bits:
        bits_ref = refs[i]; i += 1
    o_ref = refs[i]

    x = x_ref[...].astype(jnp.float32)       # (tile_B, C, tile_T): lanes = time
    g = g_ref[...].astype(jnp.float32)       # (C, 1): broadcasts over (tB, C, tT)
    b = b_ref[...].astype(jnp.float32)

    # --- LayerNorm over n_feats (sublane axis); biased variance, like torch ---
    mean = jnp.mean(x, axis=1, keepdims=True)
    xc = x - mean
    var = jnp.mean(xc * xc, axis=1, keepdims=True)
    y = xc * jax.lax.rsqrt(var + eps) * g + b

    # --- exact (erf-based) GELU; dropout 1/(1-p) folded into the 0.5 constant ---
    y = (half_scale * y) * (1.0 + _erf_f32(y * 0.7071067811865476))

    # --- inverted dropout: keep iff (bits & 0x7fffffff) >= threshold ---
    if use_dropout:
        if use_hw_prng:
            pltpu.prng_seed(seed_ref[0], pl.program_id(0), pl.program_id(1))
            bits = pltpu.prng_random_bits(y.shape)
        else:
            bits = bits_ref[...]
        r = bits & jnp.array(0x7FFFFFFF, dtype=bits.dtype)
        keep = r >= jnp.array(threshold, dtype=bits.dtype)
        y = jnp.where(keep, y, 0.0)

    if transpose_out:
        o_ref[...] = jnp.swapaxes(y, 1, 2).astype(o_ref.dtype)   # (tB, tT, C) lane-dense
    else:
        o_ref[...] = y.astype(o_ref.dtype)                       # (tB, C, tT) lane-dense


# ---------------------------------------------------------------------------
# wrapper
# ---------------------------------------------------------------------------

def act_drop_norm_cnn1d(x, gamma, beta, *, dropout=0.1, eps=1e-5, keep_shape=False,
                        training=True, seed=0, block_t=None, block_b=None):
    """x: (B, n_feats, T). Returns (B, T, n_feats), or (B, n_feats, T) if keep_shape."""
    B, C, T = x.shape
    out_dtype = x.dtype
    itemsize = x.dtype.itemsize

    p = float(dropout)
    use_dropout = bool(training) and p > 0.0
    use_hw_prng = use_dropout and jax.default_backend() == "tpu"
    use_ext_bits = use_dropout and not use_hw_prng

    if use_dropout and p >= 1.0:
        threshold, inv_keep = 2**31 - 1, 0.0
    elif use_dropout:
        threshold = min(int(round(p * (2**31))), 2**31 - 1)
        inv_keep = 1.0 / (1.0 - p)
    else:
        threshold, inv_keep = 0, 1.0
    half_scale = 0.5 * inv_keep

    # --- per-generation VMEM budget & tile sizing (big, roofline-friendly blocks) ---
    vmem_phys = _vmem_capacity_bytes()
    ws_budget = vmem_phys // 4
    tile_b, tile_t = _pick_tiles(B, C, T, itemsize,
                                 4 if use_ext_bits else 0, ws_budget)
    if block_t is not None:                         # test/debug override
        bt = int(block_t)
        tile_t = T if bt >= T else max(128, (bt // 128) * 128)
    if block_b is not None:
        tile_b = max(1, min(B, int(block_b)))
        while B % tile_b:
            tile_b -= 1

    # In-kernel transposed (lane-dense) output only when C is a lane multiple;
    # otherwise a <128 last dim would degenerate to masked partial stores.
    transpose_out = (not keep_shape) and (C % 128 == 0) and (tile_t % 8 == 0)

    grid = (B // tile_b, pl.cdiv(T, tile_t))

    gamma2 = jnp.asarray(gamma, jnp.float32).reshape(C, 1)
    beta2 = jnp.asarray(beta, jnp.float32).reshape(C, 1)

    in_specs, args = [], []
    if use_hw_prng:
        in_specs.append(pl.BlockSpec(memory_space=pltpu.MemorySpace.SMEM))
        args.append(jnp.asarray([seed], dtype=jnp.int32))
    in_specs.append(pl.BlockSpec((tile_b, C, tile_t), lambda bi, ti: (bi, 0, ti)))
    args.append(x)
    in_specs.append(pl.BlockSpec((C, 1), lambda bi, ti: (0, 0)))
    args.append(gamma2)
    in_specs.append(pl.BlockSpec((C, 1), lambda bi, ti: (0, 0)))
    args.append(beta2)
    if use_ext_bits:
        # Fallback path (non-TPU backend only): host-generated random bits.
        bits = jax.random.bits(jax.random.PRNGKey(int(seed)), (B, C, T), dtype=jnp.uint32)
        bits = jax.lax.bitcast_convert_type(bits, jnp.int32)
        in_specs.append(pl.BlockSpec((tile_b, C, tile_t), lambda bi, ti: (bi, 0, ti)))
        args.append(bits)

    if transpose_out:
        out_shape = jax.ShapeDtypeStruct((B, T, C), out_dtype)
        out_spec = pl.BlockSpec((tile_b, tile_t, C), lambda bi, ti: (bi, ti, 0))
    else:
        out_shape = jax.ShapeDtypeStruct((B, C, T), out_dtype)
        out_spec = pl.BlockSpec((tile_b, C, tile_t), lambda bi, ti: (bi, 0, ti))

    # Explicit scoped-VMEM limit: actual working set + headroom, never past phys/2.
    bpe = 2 * (2 * itemsize + (4 if use_ext_bits else 0)) + 12
    block_bytes = tile_b * C * tile_t * bpe + (2 << 20)
    vmem_limit = int(min(vmem_phys // 2, max(block_bytes, 32 << 20)))

    kernel = functools.partial(
        _act_drop_norm_kernel, eps=float(eps), threshold=int(threshold),
        half_scale=float(half_scale), use_hw_prng=use_hw_prng,
        use_ext_bits=use_ext_bits, use_dropout=use_dropout,
        transpose_out=transpose_out)

    out = pl.pallas_call(
        kernel,
        out_shape=out_shape,
        grid=grid,
        in_specs=in_specs,
        out_specs=out_spec,
        compiler_params=pltpu.CompilerParams(
            dimension_semantics=("parallel", "parallel"),
            vmem_limit_bytes=vmem_limit),
    )(*args)

    if keep_shape:
        return out                              # (B, n_feats, T): zero transposes anywhere
    if transpose_out:
        return out                              # kernel already wrote (B, T, n_feats)
    # C not a lane multiple: one XLA relayout of the output gives (B, T, n_feats).
    return jnp.transpose(out, (0, 2, 1))


# ---------------------------------------------------------------------------
# demo / checks
# ---------------------------------------------------------------------------

def _reference(x, gamma, beta, eps=1e-5):
    xt = jnp.transpose(x, (0, 2, 1)).astype(jnp.float32)
    mu = jnp.mean(xt, axis=-1, keepdims=True)
    var = jnp.mean((xt - mu) ** 2, axis=-1, keepdims=True)
    y = (xt - mu) * jax.lax.rsqrt(var + eps) * gamma + beta
    return 0.5 * y * (1.0 + jax.lax.erf(y * 0.7071067811865476))


if __name__ == "__main__":
    key = jax.random.PRNGKey(0)
    B, n_feats, T = 2, 32, 256
    x = jax.random.normal(key, (B, n_feats, T), dtype=jnp.float32)

    # nn.LayerNorm default init: weight=1, bias=0
    gamma = jnp.ones((n_feats,), jnp.float32)
    beta = jnp.zeros((n_feats,), jnp.float32)

    # training path, keep_shape=False -> (B, T, n_feats)
    out = act_drop_norm_cnn1d(x, gamma, beta, dropout=0.1, keep_shape=False,
                              training=True, seed=1234)
    out = jax.block_until_ready(out)
    assert out.shape == (B, T, n_feats)
    assert bool(jnp.all(jnp.isfinite(out)))
    zero_frac = float(jnp.mean((out == 0.0).astype(jnp.float32)))
    assert 0.05 < zero_frac < 0.15, f"dropout zero fraction {zero_frac}"

    # training path, keep_shape=True -> native (B, n_feats, T), identical values
    out2 = act_drop_norm_cnn1d(x, gamma, beta, dropout=0.1, keep_shape=True,
                               training=True, seed=1234)
    out2 = jax.block_until_ready(out2)
    assert out2.shape == (B, n_feats, T)
    assert bool(jnp.array_equal(out, jnp.transpose(out2, (0, 2, 1))))

    # eval mode, ragged T with a forced 128-wide tile (partial last block, no jnp.pad),
    # non-trivial affine, vs a pure-JAX reference.
    T2 = 200
    x2 = jax.random.normal(jax.random.PRNGKey(1), (B, n_feats, T2), jnp.float32)
    g2 = 1.0 + 0.1 * jax.random.normal(jax.random.PRNGKey(2), (n_feats,), jnp.float32)
    b2 = 0.1 * jax.random.normal(jax.random.PRNGKey(3), (n_feats,), jnp.float32)
    got = act_drop_norm_cnn1d(x2, g2, b2, dropout=0.1, keep_shape=False,
                              training=False, block_t=128)
    got = jax.block_until_ready(got)
    ref = _reference(x2, g2, b2)
    assert got.shape == ref.shape
    assert jnp.allclose(got, ref, atol=1e-3, rtol=1e-4), \
        float(jnp.max(jnp.abs(got - ref)))

    # eval mode, n_feats=128: exercises the in-kernel transposed, lane-dense output path.
    C3, T3 = 128, 256
    x3 = jax.random.normal(jax.random.PRNGKey(4), (B, C3, T3), jnp.float32)
    g3 = jnp.ones((C3,), jnp.float32)
    b3 = jnp.zeros((C3,), jnp.float32)
    got3 = act_drop_norm_cnn1d(x3, g3, b3, dropout=0.1, keep_shape=False, training=False)
    got3 = jax.block_until_ready(got3)
    assert got3.shape == (B, T3, C3)
    ref3 = _reference(x3, g3, b3)
    assert jnp.allclose(got3, ref3, atol=1e-3, rtol=1e-4)

    # bf16 in / bf16 out (f32 statistics in-kernel), eval mode.
    xb = x.astype(jnp.bfloat16)
    outb = act_drop_norm_cnn1d(xb, gamma, beta, dropout=0.1, keep_shape=False,
                               training=False)
    outb = jax.block_until_ready(outb)
    assert outb.dtype == jnp.bfloat16 and outb.shape == (B, T, n_feats)
    refb = _reference(xb.astype(jnp.float32), gamma, beta)
    assert jnp.allclose(outb.astype(jnp.float32), refb, atol=3e-2, rtol=3e-2)

    print("KERNEL_OK")
</pallas_src>

<mosaic_0001>
module attributes {stable_mosaic.version = 11 : i64} {
  func.func @_act_drop_norm_kernel(%arg0: i32, %arg1: i32, %arg2: memref<1x32x256xf32, #tpu.memory_space<vmem>>, %arg3: memref<32x1xf32, #tpu.memory_space<vmem>>, %arg4: memref<32x1xf32, #tpu.memory_space<vmem>>, %arg5: memref<1x32x256xi32, #tpu.memory_space<vmem>>, %arg6: memref<1x32x256xf32, #tpu.memory_space<vmem>>) attributes {dimension_semantics = [#tpu.dimension_semantics<parallel>, #tpu.dimension_semantics<parallel>], iteration_bounds = array<i64: 2, 1>, scalar_prefetch = 0 : i64, scratch_operands = 0 : i64, tpu.core_type = #tpu.core_type<tc>, window_params = [{transform_indices = @transform_0, window_bounds = array<i64: 1, 32, 256>}, {pipeline_mode = #tpu.pipeline_mode<synchronous>, transform_indices = @transform_1, window_bounds = array<i64: 32, 1>}, {pipeline_mode = #tpu.pipeline_mode<synchronous>, transform_indices = @transform_2, window_bounds = array<i64: 32, 1>}, {transform_indices = @transform_3, window_bounds = array<i64: 1, 32, 256>}, {transform_indices = @transform_4, window_bounds = array<i64: 1, 32, 256>}]} {
    %c0 = arith.constant 0 : index
    %c0_0 = arith.constant 0 : index
    %c0_1 = arith.constant 0 : index
    %0 = vector.load %arg2[%c0, %c0_0, %c0_1] : memref<1x32x256xf32, #tpu.memory_space<vmem>>, vector<1x32x256xf32>
    %c0_2 = arith.constant 0 : index
    %c0_3 = arith.constant 0 : index
    %1 = vector.load %arg3[%c0_2, %c0_3] : memref<32x1xf32, #tpu.memory_space<vmem>>, vector<32x1xf32>
    %c0_4 = arith.constant 0 : index
    %c0_5 = arith.constant 0 : index
    %2 = vector.load %arg4[%c0_4, %c0_5] : memref<32x1xf32, #tpu.memory_space<vmem>>, vector<32x1xf32>
    %cst = arith.constant dense<0.000000e+00> : vector<1x256xf32>
    %3 = vector.multi_reduction <add>, %0, %cst [1] : vector<1x32x256xf32> to vector<1x256xf32>
    %4 = vector.shape_cast %3 : vector<1x256xf32> to vector<1x1x256xf32>
    %cst_6 = arith.constant 3.200000e+01 : f32
    %5 = vector.broadcast %cst_6 : f32 to vector<1x1x256xf32>
    %6 = arith.divf %4, %5 : vector<1x1x256xf32>
    %7 = vector.broadcast %6 : vector<1x1x256xf32> to vector<1x32x256xf32>
    %8 = arith.subf %0, %7 : vector<1x32x256xf32>
    %9 = arith.mulf %8, %8 : vector<1x32x256xf32>
    %cst_7 = arith.constant dense<0.000000e+00> : vector<1x256xf32>
    %10 = vector.multi_reduction <add>, %9, %cst_7 [1] : vector<1x32x256xf32> to vector<1x256xf32>
    %11 = vector.shape_cast %10 : vector<1x256xf32> to vector<1x1x256xf32>
    %cst_8 = arith.constant 3.200000e+01 : f32
    %12 = vector.broadcast %cst_8 : f32 to vector<1x1x256xf32>
    %13 = arith.divf %11, %12 : vector<1x1x256xf32>
    %cst_9 = arith.constant 9.99999974E-6 : f32
    %14 = vector.broadcast %cst_9 : f32 to vector<1x1x256xf32>
    %15 = arith.addf %13, %14 : vector<1x1x256xf32>
    %16 = math.rsqrt %15 : vector<1x1x256xf32>
    %17 = vector.broadcast %16 : vector<1x1x256xf32> to vector<1x32x256xf32>
    %18 = arith.mulf %8, %17 : vector<1x32x256xf32>
    %19 = vector.shape_cast %1 : vector<32x1xf32> to vector<1x32x1xf32>
    %20 = vector.broadcast %19 : vector<1x32x1xf32> to vector<1x32x256xf32>
    %21 = arith.mulf %18, %20 : vector<1x32x256xf32>
    %22 = vector.shape_cast %2 : vector<32x1xf32> to vector<1x32x1xf32>
    %23 = vector.broadcast %22 : vector<1x32x1xf32> to vector<1x32x256xf32>
    %24 = arith.addf %21, %23 : vector<1x32x256xf32>
    %cst_10 = arith.constant 0.555555582 : f32
    %25 = vector.broadcast %cst_10 : f32 to vector<1x32x256xf32>
    %26 = arith.mulf %25, %24 : vector<1x32x256xf32>
    %cst_11 = arith.constant 0.707106769 : f32
    %27 = vector.broadcast %cst_11 : f32 to vector<1x32x256xf32>
    %28 = arith.mulf %24, %27 : vector<1x32x256xf32>
    %cst_12 = arith.constant 0.000000e+00 : f32
    %29 = vector.broadcast %cst_12 : f32 to vector<1x32x256xf32>
    %30 = arith.cmpf olt, %28, %29 : vector<1x32x256xf32>
    %cst_13 = arith.constant -1.000000e+00 : f32
    %cst_14 = arith.constant 1.000000e+00 : f32
    %31 = vector.broadcast %cst_13 : f32 to vector<1x32x256xf32>
    %32 = vector.broadcast %cst_14 : f32 to vector<1x32x256xf32>
    %33 = arith.select %30, %31, %32 : vector<1x32x256xi1>, vector<1x32x256xf32>
    %34 = math.absf %28 : vector<1x32x256xf32>
    %cst_15 = arith.constant 0.327591091 : f32
    %35 = vector.broadcast %cst_15 : f32 to vector<1x32x256xf32>
    %36 = arith.mulf %35, %34 : vector<1x32x256xf32>
    %cst_16 = arith.constant 1.000000e+00 : f32
    %37 = vector.broadcast %cst_16 : f32 to vector<1x32x256xf32>
    %38 = arith.addf %37, %36 : vector<1x32x256xf32>
    %39 = tpu.reciprocal %38 {approx = true} : vector<1x32x256xf32> -> vector<1x32x256xf32>
    %40 = arith.mulf %38, %39 : vector<1x32x256xf32>
    %cst_17 = arith.constant 2.000000e+00 : f32
    %41 = vector.broadcast %cst_17 : f32 to vector<1x32x256xf32>
    %42 = arith.subf %41, %40 : vector<1x32x256xf32>
    %43 = arith.mulf %39, %42 : vector<1x32x256xf32>
    %cst_18 = arith.constant 1.06140542 : f32
    %44 = vector.broadcast %cst_18 : f32 to vector<1x32x256xf32>
    %45 = arith.mulf %44, %43 : vector<1x32x256xf32>
    %cst_19 = arith.constant -1.45315206 : f32
    %46 = vector.broadcast %cst_19 : f32 to vector<1x32x256xf32>
    %47 = arith.addf %45, %46 : vector<1x32x256xf32>
    %48 = arith.mulf %47, %43 : vector<1x32x256xf32>
    %cst_20 = arith.constant 1.42141378 : f32
    %49 = vector.broadcast %cst_20 : f32 to vector<1x32x256xf32>
    %50 = arith.addf %48, %49 : vector<1x32x256xf32>
    %51 = arith.mulf %50, %43 : vector<1x32x256xf32>
    %cst_21 = arith.constant -0.284496725 : f32
    %52 = vector.broadcast %cst_21 : f32 to vector<1x32x256xf32>
    %53 = arith.addf %51, %52 : vector<1x32x256xf32>
    %54 = arith.mulf %53, %43 : vector<1x32x256xf32>
    %cst_22 = arith.constant 0.254829586 : f32
    %55 = vector.broadcast %cst_22 : f32 to vector<1x32x256xf32>
    %56 = arith.addf %54, %55 : vector<1x32x256xf32>
    %57 = arith.mulf %56, %43 : vector<1x32x256xf32>
    %cst_23 = arith.constant 0.000000e+00 : f32
    %58 = vector.broadcast %cst_23 : f32 to vector<1x32x256xf32>
    %59 = arith.subf %58, %34 : vector<1x32x256xf32>
    %60 = arith.mulf %59, %34 : vector<1x32x256xf32>
    %61 = math.exp %60 : vector<1x32x256xf32>
    %62 = arith.mulf %57, %61 : vector<1x32x256xf32>
    %cst_24 = arith.constant 1.000000e+00 : f32
    %63 = vector.broadcast %cst_24 : f32 to vector<1x32x256xf32>
    %64 = arith.subf %63, %62 : vector<1x32x256xf32>
    %65 = arith.mulf %33, %64 : vector<1x32x256xf32>
    %cst_25 = arith.constant 1.000000e+00 : f32
    %66 = vector.broadcast %cst_25 : f32 to vector<1x32x256xf32>
    %67 = arith.addf %66, %65 : vector<1x32x256xf32>
    %68 = arith.mulf %26, %67 : vector<1x32x256xf32>
    %c0_26 = arith.constant 0 : index
    %c0_27 = arith.constant 0 : index
    %c0_28 = arith.constant 0 : index
    %69 = vector.load %arg5[%c0_26, %c0_27, %c0_28] : memref<1x32x256xi32, #tpu.memory_space<vmem>>, vector<1x32x256xi32>
    %c2147483647_i32 = arith.constant 2147483647 : i32
    %70 = vector.broadcast %c2147483647_i32 : i32 to vector<1x32x256xi32>
    %71 = arith.andi %69, %70 : vector<1x32x256xi32>
    %c214748365_i32 = arith.constant 214748365 : i32
    %72 = vector.broadcast %c214748365_i32 : i32 to vector<1x32x256xi32>
    %73 = arith.cmpi sge, %71, %72 : vector<1x32x256xi32>
    %cst_29 = arith.constant 0.000000e+00 : f32
    %74 = vector.broadcast %cst_29 : f32 to vector<1x32x256xf32>
    %75 = arith.select %73, %68, %74 : vector<1x32x256xi1>, vector<1x32x256xf32>
    %c0_30 = arith.constant 0 : index
    %c0_31 = arith.constant 0 : index
    %c0_32 = arith.constant 0 : index
    %76 = vector.load %arg6[%c0_30, %c0_31, %c0_32] : memref<1x32x256xf32, #tpu.memory_space<vmem>>, vector<1x32x256xf32>
    tpu.vector_store %arg6[%c0_30, %c0_31, %c0_32], %75 {strides = array<i32>} : memref<1x32x256xf32, #tpu.memory_space<vmem>>, vector<1x32x256xf32>,
    return
  }
  func.func @transform_0(%arg0: i32, %arg1: i32) -> (i32, i32, i32) {
    %c0_i32 = arith.constant 0 : i32
    %c0_i32_0 = arith.constant 0 : i32
    return %arg0, %c0_i32, %arg1 : i32, i32, i32
  }
  func.func @transform_1(%arg0: i32, %arg1: i32) -> (i32, i32) {
    %c0_i32 = arith.constant 0 : i32
    %c0_i32_0 = arith.constant 0 : i32
    %c0_i32_1 = arith.constant 0 : i32
    return %c0_i32, %c0_i32_0 : i32, i32
  }
  func.func @transform_2(%arg0: i32, %arg1: i32) -> (i32, i32) {
    %c0_i32 = arith.constant 0 : i32
    %c0_i32_0 = arith.constant 0 : i32
    %c0_i32_1 = arith.constant 0 : i32
    return %c0_i32, %c0_i32_0 : i32, i32
  }
  func.func @transform_3(%arg0: i32, %arg1: i32) -> (i32, i32, i32) {
    %c0_i32 = arith.constant 0 : i32
    %c0_i32_0 = arith.constant 0 : i32
    return %arg0, %c0_i32, %arg1 : i32, i32, i32
  }
  func.func @transform_4(%arg0: i32, %arg1: i32) -> (i32, i32, i32) {
    %c0_i32 = arith.constant 0 : i32
    %c0_i32_0 = arith.constant 0 : i32
    return %arg0, %c0_i32, %arg1 : i32, i32, i32
  }
}

</mosaic_0001>

<llo_original>
// kernel: tpu_custom_call.1
$region0: #{tpu_custom_call.1}
  #allocation0 [shape = 'u32[]', space=smem, size = 0x4, offset = 0x4, fixed_abs, tag = 'smem constant byte address 0x4 - core index']
  #allocation1 [shape = 'u32[72,128]{1,0:T(1,128)}', space=vmem, size = 0x9000, scoped, tag = 'internal scratch']
  %s0 = inlined_call_operand.hbm [shape: f32[2,32,256], index: 0, kind: input, shape index: {}]
  %s1 = inlined_call_operand.vmem [shape: f32[32,1], index: 1, kind: input, shape index: {}]
  %s2 = inlined_call_operand.vmem [shape: f32[32,1], index: 2, kind: input, shape index: {}]
  %s3 = inlined_call_operand.hbm [shape: s32[2,32,256], index: 3, kind: input, shape index: {}]
  %s4 = inlined_call_operand.hbm [shape: f32[2,32,256], index: 4, kind: output, shape index: {}]
  %s5 = sld [smem:[#allocation0]]
  $region57: #{tpu_custom_call.1} parent=0
    _
  %s7 = ssub.s32 1, %s5
  %s8 = scalar_select 0, %s7, %s5
  $region1: #{tpu_custom_call.1} parent=0
    #allocation2 [shape = 'u8[65536]{0}', space=vmem, size = 0x10000, scoped, tag = 'input window, operand 0']
    #allocation3 [shape = 's32[2]{0}', space=sflag, size = 0x8, scoped, tag = 'scoped memory for tpu_custom_call.1']
    #allocation4 [shape = 's32[2]{0}', space=sflag, size = 0x8, scoped, tag = 'scoped memory for tpu_custom_call.1']
    #allocation5 [shape = 'u8[65536]{0}', space=vmem, size = 0x10000, scoped, tag = 'input window, operand 3']
    #allocation6 [shape = 's32[2]{0}', space=sflag, size = 0x8, scoped, tag = 'scoped memory for tpu_custom_call.1']
    #allocation7 [shape = 'u8[65536]{0}', space=vmem, size = 0x10000, scoped, tag = 'output window, operand 0']
    %9 = vsyncpa [#allocation3], 0
    %s10 = scalar_lea.sflag [#allocation3], 1
    %11 = vsyncpa %s10, 0
    %12 = vsyncpa [#allocation6], 0
    %s13 = scalar_lea.sflag [#allocation6], 1
    %14 = vsyncpa %s13, 0
    %15 = vsyncpa [#allocation4], 0
    %s16 = scalar_lea.sflag [#allocation4], 1
    %17 = vsyncpa %s16, 0
    loop: start=0, step=1, limit=4
    $region2: #{tpu_custom_call.1} parent=1 // loop_pre_header
      _
    $region3: #{tpu_custom_call.1} parent=1 // loop_header
      %s19 = sphi 0, %s23
      %p20 = scmp.ge.s32.totalorder %s19, 4
      %s26 = sphi 0, %s38
      %s27 = sphi 0, %s34
      %s28 = sphi 0, %s26
      %s29 = sphi 0, %s27
      %s30 = sphi 0, %s28
      %s31 = sphi 0, %s29
      %s43 = sphi 0, %s45
      %s46 = sphi 0, %s43
      %s47 = sphi 0, %s46
      %s63 = sphi 0, %s47
      %s67 = sphi 0, %s67
      %s69 = sphi 0, %s67
      %s70 = sphi 0, %s69
      %s84 = sphi 0, %s70
      %s88 = sphi 0, %s88
      %s90 = sphi 0, %s88
      %s91 = sphi 0, %s90
      %s105 = sphi 0, %s91
      %s113 = sphi 0, %s115
      %s116 = sphi 0, %s113
      %s117 = sphi 0, %s116
      %s133 = sphi 0, %s117
      %s141 = sphi 0, %s143
      %s144 = sphi 0, %s141
      %s145 = sphi 0, %s144
      %s161 = sphi 0, %s145
    $region4: #{tpu_custom_call.1} parent=1 // loop_header_branch
      %22 = sbr.rel (%p20) target = $region8
    $region5: #{tpu_custom_call.1} parent=1 // loop_body
      %s24 = ssub.s32 %s19, 1
      %s25 = ssub.s32 %s19, 2
      %s32 = sadd.s32 1, %s27
      %p33 = scmp.ge.s32.totalorder %s32, 1
      %s34 = scalar_select %p33, 0, %s32
      %s35 = sadd.s32 1, %s26
      %s36 = scalar_select %p33, %s35, %s26
      %p37 = scmp.ge.s32.totalorder %s36, 2
      %s38 = scalar_select %p37, 0, %s36
      %s39 = ssub.s32 %s26, %s38
      %s40 = ssub.s32 %s27, %s34
      %s41 = sor.u32 %s39, %s40
      %p42 = scmp.eq.s32.totalorder %s41, 0
      %s44 = sadd.s32 %s43, 1
      %s45 = scalar_select %p42, %s43, %s44
      %p48 = pneg %p42
      %p49 = scmp.eq.s32.totalorder %s19, 1
      %p50 = por %p48, %p49
      %p51 = scmp.ne.s32.totalorder %s43, %s46
      %p52 = scmp.eq.s32.totalorder %s19, 0
      %p53 = por %p51, %p52
      %p54 = scmp.ne.s32.totalorder %s43, %s46
      %p55 = scmp.eq.s32.totalorder %s24, 1
      %p56 = por %p54, %p55
      %p57 = scmp.ne.s32.totalorder %s46, %s47
      %p58 = scmp.eq.s32.totalorder %s24, 0
      %p59 = por %p57, %p58
      %p60 = scmp.ne.s32.totalorder %s46, %s47
      %p61 = scmp.eq.s32.totalorder %s25, 1
      %p62 = por %p60, %p61
      %p64 = scmp.ne.s32.totalorder %s47, %s63
      %p65 = scmp.eq.s32.totalorder %s25, 0
      %p66 = por %p64, %p65
      %s68 = sadd.s32 %s67, 1
      %p71 = scmp.eq.s32.totalorder %s19, 1
      %p72 = scmp.ne.s32.totalorder %s67, %s69
      %p73 = scmp.eq.s32.totalorder %s19, 0
      %p74 = por %p72, %p73
      %p75 = scmp.ne.s32.totalorder %s67, %s69
      %p76 = scmp.eq.s32.totalorder %s24, 1
      %p77 = por %p75, %p76
      %p78 = scmp.ne.s32.totalorder %s69, %s70
      %p79 = scmp.eq.s32.totalorder %s24, 0
      %p80 = por %p78, %p79
      %p81 = scmp.ne.s32.totalorder %s69, %s70
      %p82 = scmp.eq.s32.totalorder %s25, 1
      %p83 = por %p81, %p82
      %p85 = scmp.ne.s32.totalorder %s70, %s84
      %p86 = scmp.eq.s32.totalorder %s25, 0
      %p87 = por %p85, %p86
      %s89 = sadd.s32 %s88, 1
      %p92 = scmp.eq.s32.totalorder %s19, 1
      %p93 = scmp.ne.s32.totalorder %s88, %s90
      %p94 = scmp.eq.s32.totalorder %s19, 0
      %p95 = por %p93, %p94
      %p96 = scmp.ne.s32.totalorder %s88, %s90
      %p97 = scmp.eq.s32.totalorder %s24, 1
      %p98 = por %p96, %p97
      %p99 = scmp.ne.s32.totalorder %s90, %s91
      %p100 = scmp.eq.s32.totalorder %s24, 0
      %p101 = por %p99, %p100
      %p102 = scmp.ne.s32.totalorder %s90, %s91
      %p103 = scmp.eq.s32.totalorder %s25, 1
      %p104 = por %p102, %p103
      %p106 = scmp.ne.s32.totalorder %s91, %s105
      %p107 = scmp.eq.s32.totalorder %s25, 0
      %p108 = por %p106, %p107
      %s109 = ssub.s32 %s26, %s38
      %s110 = ssub.s32 %s27, %s34
      %s111 = sor.u32 %s109, %s110
      %p112 = scmp.eq.s32.totalorder %s111, 0
      %s114 = sadd.s32 %s113, 1
      %s115 = scalar_select %p112, %s113, %s114
      %p118 = pneg %p112
      %p119 = scmp.eq.s32.totalorder %s19, 1
      %p120 = por %p118, %p119
      %p121 = scmp.ne.s32.totalorder %s113, %s116
      %p122 = scmp.eq.s32.totalorder %s19, 0
      %p123 = por %p121, %p122
      %p124 = scmp.ne.s32.totalorder %s113, %s116
      %p125 = scmp.eq.s32.totalorder %s24, 1
      %p126 = por %p124, %p125
      %p127 = scmp.ne.s32.totalorder %s116, %s117
      %p128 = scmp.eq.s32.totalorder %s24, 0
      %p129 = por %p127, %p128
      %p130 = scmp.ne.s32.totalorder %s116, %s117
      %p131 = scmp.eq.s32.totalorder %s25, 1
      %p132 = por %p130, %p131
      %p134 = scmp.ne.s32.totalorder %s117, %s133
      %p135 = scmp.eq.s32.totalorder %s25, 0
      %p136 = por %p134, %p135
      %s137 = ssub.s32 %s26, %s38
      %s138 = ssub.s32 %s27, %s34
      %s139 = sor.u32 %s137, %s138
      %p140 = scmp.eq.s32.totalorder %s139, 0
      %s142 = sadd.s32 %s141, 1
      %s143 = scalar_select %p140, %s141, %s142
      %p146 = pneg %p140
      %p147 = scmp.eq.s32.totalorder %s19, 1
      %p148 = por %p146, %p147
      %p149 = scmp.ne.s32.totalorder %s141, %s144
      %p150 = scmp.eq.s32.totalorder %s19, 0
      %p151 = por %p149, %p150
      %p152 = scmp.ne.s32.totalorder %s141, %s144
      %p153 = scmp.eq.s32.totalorder %s24, 1
      %p154 = por %p152, %p153
      %p155 = scmp.ne.s32.totalorder %s144, %s145
      %p156 = scmp.eq.s32.totalorder %s24, 0
      %p157 = por %p155, %p156
      %p158 = scmp.ne.s32.totalorder %s144, %s145
      %p159 = scmp.eq.s32.totalorder %s25, 1
      %p160 = por %p158, %p159
      %p162 = scmp.ne.s32.totalorder %s145, %s161
      %p163 = scmp.eq.s32.totalorder %s25, 0
      %p164 = por %p162, %p163
      %p165 = scmp.le.s32.totalorder 1, %s19
      %p166 = scmp.lt.s32.totalorder %s19, 3
      %p167 = pnand %p165, %p166
      %p168 = pneg %p167
      // Predicated region
      $region9: #{tpu_custom_call.1} parent=5 // pred_check
        _
      $region10: #{tpu_custom_call.1} parent=5 // pred_check_branch
        %170 = sbr.rel (%p167) target = $region12
      $region11: #{tpu_custom_call.1} parent=5 // pred_region
        %s171 = ssub.s32 %s19, 1
        // Predicated region
        $region13: #{tpu_custom_call.1} parent=11 // pred_check
          %p172 = pneg %p80
        $region14: #{tpu_custom_call.1} parent=11 // pred_check_branch
          %174 = sbr.rel (%p172) target = $region16
        $region15: #{tpu_custom_call.1} parent=11 // pred_region
          _
        $region16: #{tpu_custom_call.1} parent=11 // pred_fallthru
          _
        // Predicated region
        $region17: #{tpu_custom_call.1} parent=11 // pred_check
          %p175 = pneg %p101
        $region18: #{tpu_custom_call.1} parent=11 // pred_check_branch
          %177 = sbr.rel (%p175) target = $region20
        $region19: #{tpu_custom_call.1} parent=11 // pred_region
          _
        $region20: #{tpu_custom_call.1} parent=11 // pred_fallthru
          _
      $region12: #{tpu_custom_call.1} parent=5 // pred_fallthru
        _
      %p178 = scmp.lt.s32.totalorder %s19, 2
      // Predicated region
      $region21: #{tpu_custom_call.1} parent=5 // pred_check
        %p179 = pneg %p178
      $region22: #{tpu_custom_call.1} parent=5 // pred_check_branch
        %181 = sbr.rel (%p179) target = $region24
      $region23: #{tpu_custom_call.1} parent=5 // pred_region
        // Predicated region
        $region25: #{tpu_custom_call.1} parent=23 // pred_check
          %p182 = pneg %p53
        $region26: #{tpu_custom_call.1} parent=23 // pred_check_branch
          %184 = sbr.rel (%p182) target = $region28
        $region27: #{tpu_custom_call.1} parent=23 // pred_region
          %s185 = sand.u32 %s43, 1
          %s186 = scalar_lea.sflag [#allocation3], %s185
          %s187 = sand.u32 %s43, 1
          %s188 = smul.addr %s187, 64
          %s189 = scalar_lea.vmem [#allocation2], %s188
          %s190 = smul.u32 2, %s27
          %192 = vsyncadd %s186, 0
          %s193 = smul.addr %s26, 8
          %s194 = sadd.s32 %s190, %s193
          %s195 = smul.addr %s194, 8
          %s196 = scalar_lea.hbm %s0, %s195
          %s197 = sshll.u32 %s196, 4
          %s198 = int_to_ptr.hbm [resolvable:$true] %s197
          %s199 = sshll.u32 %s189, 4
          %s200 = int_to_ptr.vmem [resolvable:$true] %s199
          %205 = dma.hbm_to_vmem [thread:$0]  %s198, 1024, %s200, %s186, 256, 256, 16
        $region28: #{tpu_custom_call.1} parent=23 // pred_fallthru
          _
        // Predicated region
        $region29: #{tpu_custom_call.1} parent=23 // pred_check
          %p206 = pneg %p123
        $region30: #{tpu_custom_call.1} parent=23 // pred_check_branch
          %208 = sbr.rel (%p206) target = $region32
        $region31: #{tpu_custom_call.1} parent=23 // pred_region
          %s209 = sand.u32 %s113, 1
          %s210 = scalar_lea.sflag [#allocation6], %s209
          %s211 = sand.u32 %s113, 1
          %s212 = smul.addr %s211, 64
          %s213 = scalar_lea.vmem [#allocation5], %s212
          %s214 = smul.u32 2, %s27
          %216 = vsyncadd %s210, 0
          %s217 = smul.addr %s26, 8
          %s218 = sadd.s32 %s214, %s217
          %s219 = smul.addr %s218, 8
          %s220 = scalar_lea.hbm %s3, %s219
          %s221 = sshll.u32 %s220, 4
          %s222 = int_to_ptr.hbm [resolvable:$true] %s221
          %s223 = sshll.u32 %s213, 4
          %s224 = int_to_ptr.vmem [resolvable:$true] %s223
          %229 = dma.hbm_to_vmem [thread:$0]  %s222, 1024, %s224, %s210, 256, 256, 16
        $region32: #{tpu_custom_call.1} parent=23 // pred_fallthru
          _
      $region24: #{tpu_custom_call.1} parent=5 // pred_fallthru
        _
      %p230 = scmp.le.s32.totalorder 1, %s19
      %p231 = scmp.lt.s32.totalorder %s19, 3
      %p232 = pnand %p230, %p231
      %p233 = pneg %p232
      // Predicated region
      $region33: #{tpu_custom_call.1} parent=5 // pred_check
        _
      $region34: #{tpu_custom_call.1} parent=5 // pred_check_branch
        %235 = sbr.rel (%p232) target = $region36
      $region35: #{tpu_custom_call.1} parent=5 // pred_region
        %s236 = ssub.s32 %s19, 1
        %s237 = sand.u32 %s46, 1
        %s238 = scalar_lea.sflag [#allocation3], %s237
        %s239 = sand.u32 %s46, 1
        %s240 = smul.addr %s239, 64
        %s241 = scalar_lea.vmem [#allocation2], %s240
        // Predicated region
        $region37: #{tpu_custom_call.1} parent=35 // pred_check
          %p242 = pneg %p59
        $region38: #{tpu_custom_call.1} parent=35 // pred_check_branch
          %244 = sbr.rel (%p242) target = $region40
        $region39: #{tpu_custom_call.1} parent=35 // pred_region
          %246 = dma.done %s238, 1024
        $region40: #{tpu_custom_call.1} parent=35 // pred_fallthru
          _
        %s247 = sand.u32 %s116, 1
        %s248 = scalar_lea.sflag [#allocation6], %s247
        %s249 = sand.u32 %s116, 1
        %s250 = smul.addr %s249, 64
        %s251 = scalar_lea.vmem [#allocation5], %s250
        // Predicated region
        $region41: #{tpu_custom_call.1} parent=35 // pred_check
          %p252 = pneg %p129
        $region42: #{tpu_custom_call.1} parent=35 // pred_check_branch
          %254 = sbr.rel (%p252) target = $region44
        $region43: #{tpu_custom_call.1} parent=35 // pred_region
          %256 = dma.done %s248, 1024
        $region44: #{tpu_custom_call.1} parent=35 // pred_fallthru
          _
        %s257 = sand.u32 %s46, 1
        %s258 = scalar_lea.sflag [#allocation3], %s257
        %s259 = sand.u32 %s46, 1
        %s260 = smul.addr %s259, 64
        %s261 = scalar_lea.vmem [#allocation2], %s260
        %p262 = pneg %p59
        %p263 = pneg %p56
        %p264 = pneg %p80
        %p265 = pneg %p77
        %p266 = pneg %p101
        %p267 = pneg %p98
        %s268 = sand.u32 %s116, 1
        %s269 = scalar_lea.sflag [#allocation6], %s268
        %s270 = sand.u32 %s116, 1
        %s271 = smul.addr %s270, 64
        %s272 = scalar_lea.vmem [#allocation5], %s271
        %p273 = pneg %p129
        %p274 = pneg %p126
        %p275 = pneg %p157
        %p276 = pneg %p154
        %s277 = sand.u32 %s144, 1
        %s278 = scalar_lea.sflag [#allocation4], %s277
        %s279 = sand.u32 %s144, 1
        %s280 = smul.addr %s279, 64
        %s281 = scalar_lea.vmem [#allocation7], %s280
        %s282 = smul.u32 2, %s29
        %s283 = smul.u32 2, %s29
        %s284 = smul.u32 2, %s29
        %v285 = vld [vmem:[%s241] sm:$0xff]
        %v286 = vld [vmem:[%s241 + $0x8] sm:$0xff]
        %v287 = vld [vmem:[%s241 + $0x10] sm:$0xff]
        %v288 = vld [vmem:[%s241 + $0x18] sm:$0xff]
        %v289 = vld [vmem:[%s241 + $0x20] sm:$0xff]
        %v290 = vld [vmem:[%s241 + $0x28] sm:$0xff]
        %v291 = vld [vmem:[%s241 + $0x30] sm:$0xff]
        %v292 = vld [vmem:[%s241 + $0x38] sm:$0xff]
        %v293 = vld [vmem:[%s1] sm:$0xff]
        %v294 = vld [vmem:[%s1 + $0x8] sm:$0xff]
        %v295 = vld [vmem:[%s1 + $0x10] sm:$0xff]
        %v296 = vld [vmem:[%s1 + $0x18] sm:$0xff]
        %v297 = vld [vmem:[%s2] sm:$0xff]
        %v298 = vld [vmem:[%s2 + $0x8] sm:$0xff]
        %v299 = vld [vmem:[%s2 + $0x10] sm:$0xff]
        %v300 = vld [vmem:[%s2 + $0x18] sm:$0xff]
        %v301 = vadd.f32 %v285, %v287
        %v302 = vadd.f32 %v301, %v289
        %v303 = vadd.f32 %v302, %v291
        %v304 = vrot.slane %v303, 4
        %v305 = vadd.f32 %v303, %v304
        %v306 = vrot.slane %v305, 2
        %v307 = vadd.f32 %v305, %v306
        %v308 = vrot.slane %v307, 1
        %v309 = vadd.f32 %v307, %v308
        %v310 = vadd.f32 %v286, %v288
        %v311 = vadd.f32 %v310, %v290
        %v312 = vadd.f32 %v311, %v292
        %v313 = vrot.slane %v312, 4
        %v314 = vadd.f32 %v312, %v313
        %v315 = vrot.slane %v314, 2
        %v316 = vadd.f32 %v314, %v315
        %v317 = vrot.slane %v316, 1
        %v318 = vadd.f32 %v316, %v317
        %v319 = vrcp.pop 32.0
        %v320 = vmul.f32 32.0, %v319
        %v321 = vsub.f32 1.0, %v320
        %v322 = vmul.f32 %v319, %v321
        %v323 = vadd.f32 %v319, %v322
        %vm324 = vweird.f32 %v319
        %v325 = vsel %vm324, %v319, %v323
        %v326 = vmul.f32 %v309, %v325
        %v327 = vmul.f32 %v318, %v325
        %v328 = vsub.f32 %v285, %v326
        %v329 = vsub.f32 %v286, %v327
        %v330 = vsub.f32 %v287, %v326
        %v331 = vsub.f32 %v288, %v327
        %v332 = vsub.f32 %v289, %v326
        %v333 = vsub.f32 %v290, %v327
        %v334 = vsub.f32 %v291, %v326
        %v335 = vsub.f32 %v292, %v327
        %v336 = vmul.f32 %v328, %v328
        %v337 = vmul.f32 %v329, %v329
        %v338 = vmul.f32 %v330, %v330
        %v339 = vmul.f32 %v331, %v331
        %v340 = vmul.f32 %v332, %v332
        %v341 = vmul.f32 %v333, %v333
        %v342 = vmul.f32 %v334, %v334
        %v343 = vmul.f32 %v335, %v335
        %v344 = vadd.f32 %v336, %v338
        %v345 = vadd.f32 %v344, %v340
        %v346 = vadd.f32 %v345, %v342
        %v347 = vrot.slane %v346, 4
        %v348 = vadd.f32 %v346, %v347
        %v349 = vrot.slane %v348, 2
        %v350 = vadd.f32 %v348, %v349
        %v351 = vrot.slane %v350, 1
        %v352 = vadd.f32 %v350, %v351
        %v353 = vadd.f32 %v337, %v339
        %v354 = vadd.f32 %v353, %v341
        %v355 = vadd.f32 %v354, %v343
        %v356 = vrot.slane %v355, 4
        %v357 = vadd.f32 %v355, %v356
        %v358 = vrot.slane %v357, 2
        %v359 = vadd.f32 %v357, %v358
        %v360 = vrot.slane %v359, 1
        %v361 = vadd.f32 %v359, %v360
        %v362 = vmul.f32 %v352, %v325
        %v363 = vmul.f32 %v361, %v325
        %v364 = vadd.f32 %v362, 1e-05
        %v365 = vadd.f32 %v363, 1e-05
        %v366 = vrsqrt.pop %v364
        %v367 = vmul.f32 %v366, %v364
        %v368 = vmul.f32 %v367, %v366
        %v369 = vmul.f32 0.5, %v368
        %v370 = vsub.f32 1.5, %v369
        %v371 = vmul.f32 %v366, %v370
        %vm372 = vweird.f32 %v364
        %vm373 = vweird.f32 %v366
        %vm374 = vmor %vm372, %vm373
        %v375 = vsel %vm374, %v366, %v371
        %v376 = vrsqrt.pop %v365
        %v377 = vmul.f32 %v376, %v365
        %v378 = vmul.f32 %v377, %v376
        %v379 = vmul.f32 0.5, %v378
        %v380 = vsub.f32 1.5, %v379
        %v381 = vmul.f32 %v376, %v380
        %vm382 = vweird.f32 %v365
        %vm383 = vweird.f32 %v376
        %vm384 = vmor %vm382, %vm383
        %v385 = vsel %vm384, %v376, %v381
        %v386 = vmul.f32 %v328, %v375
        %v387 = vmul.f32 %v329, %v385
        %v388 = vmul.f32 %v330, %v375
        %v389 = vmul.f32 %v331, %v385
        %v390 = vmul.f32 %v332, %v375
        %v391 = vmul.f32 %v333, %v385
        %v392 = vmul.f32 %v334, %v375
        %v393 = vmul.f32 %v335, %v385
        %395 = vset.pattern.permute.xlu0 0
        %396 = vperm.xlu0 %395, %v293
        %v397 = vpop.permute.xlu0 %396
        %400 = vset.pattern.permute.xlu0 0
        %401 = vperm.xlu0 %400, %v294
        %v402 = vpop.permute.xlu0 %401
        %405 = vset.pattern.permute.xlu0 0
        %406 = vperm.xlu0 %405, %v295
        %v407 = vpop.permute.xlu0 %406
        %410 = vset.pattern.permute.xlu0 0
        %411 = vperm.xlu0 %410, %v296
        %v412 = vpop.permute.xlu0 %411
        %v414 = vmul.f32 %v386, %v397
        %v415 = vmul.f32 %v387, %v397
        %v416 = vmul.f32 %v388, %v402
        %v417 = vmul.f32 %v389, %v402
        %v418 = vmul.f32 %v390, %v407
        %v419 = vmul.f32 %v391, %v407
        %v420 = vmul.f32 %v392, %v412
        %v421 = vmul.f32 %v393, %v412
        %423 = vset.pattern.permute.xlu0 0
        %424 = vperm.xlu0 %423, %v297
        %v425 = vpop.permute.xlu0 %424
        %428 = vset.pattern.permute.xlu0 0
        %429 = vperm.xlu0 %428, %v298
        %v430 = vpop.permute.xlu0 %429
        %433 = vset.pattern.permute.xlu0 0
        %434 = vperm.xlu0 %433, %v299
        %v435 = vpop.permute.xlu0 %434
        %438 = vset.pattern.permute.xlu0 0
        %439 = vperm.xlu0 %438, %v300
        %v440 = vpop.permute.xlu0 %439
        %v442 = vadd.f32 %v414, %v425
        %v443 = vadd.f32 %v415, %v425
        %v444 = vadd.f32 %v416, %v430
        %v445 = vadd.f32 %v417, %v430
        %v446 = vadd.f32 %v418, %v435
        %v447 = vadd.f32 %v419, %v435
        %v448 = vadd.f32 %v420, %v440
        %v449 = vadd.f32 %v421, %v440
        %v450 = vmul.f32 %v442, 0.5555556
        %v451 = vmul.f32 %v443, 0.5555556
        %v452 = vmul.f32 %v444, 0.5555556
        %v453 = vmul.f32 %v445, 0.5555556
        %v454 = vmul.f32 %v446, 0.5555556
        %v455 = vmul.f32 %v447, 0.5555556
        %v456 = vmul.f32 %v448, 0.5555556
        %v457 = vmul.f32 %v449, 0.5555556
        %v458 = vmul.f32 %v442, 0.70710677
        %v459 = vmul.f32 %v443, 0.70710677
        %v460 = vmul.f32 %v444, 0.70710677
        %v461 = vmul.f32 %v445, 0.70710677
        %v462 = vmul.f32 %v446, 0.70710677
        %v463 = vmul.f32 %v447, 0.70710677
        %v464 = vmul.f32 %v448, 0.70710677
        %v465 = vmul.f32 %v449, 0.70710677
        %vm466 = vcmp.lt.f32.partialorder %v458, 0.0
        %vm467 = vcmp.lt.f32.partialorder %v459, 0.0
        %vm468 = vcmp.lt.f32.partialorder %v460, 0.0
        %vm469 = vcmp.lt.f32.partialorder %v461, 0.0
        %vm470 = vcmp.lt.f32.partialorder %v462, 0.0
        %vm471 = vcmp.lt.f32.partialorder %v463, 0.0
        %vm472 = vcmp.lt.f32.partialorder %v464, 0.0
        %vm473 = vcmp.lt.f32.partialorder %v465, 0.0
        %v474 = vsel %vm466, -1.0, 1.0
        %v475 = vsel %vm467, -1.0, 1.0
        %v476 = vsel %vm468, -1.0, 1.0
        %v477 = vsel %vm469, -1.0, 1.0
        %v478 = vsel %vm470, -1.0, 1.0
        %v479 = vsel %vm471, -1.0, 1.0
        %v480 = vsel %vm472, -1.0, 1.0
        %v481 = vsel %vm473, -1.0, 1.0
        %v482 = vand.u32 2147483647, %v458
        %v483 = vand.u32 2147483647, %v459
        %v484 = vand.u32 2147483647, %v460
        %v485 = vand.u32 2147483647, %v461
        %v486 = vand.u32 2147483647, %v462
        %v487 = vand.u32 2147483647, %v463
        %v488 = vand.u32 2147483647, %v464
        %v489 = vand.u32 2147483647, %v465
        %v490 = vmul.f32 %v482, 0.3275911
        %v491 = vmul.f32 %v483, 0.3275911
        %v492 = vmul.f32 %v484, 0.3275911
        %v493 = vmul.f32 %v485, 0.3275911
        %v494 = vmul.f32 %v486, 0.3275911
        %v495 = vmul.f32 %v487, 0.3275911
        %v496 = vmul.f32 %v488, 0.3275911
        %v497 = vmul.f32 %v489, 0.3275911
        %v498 = vadd.f32 %v490, 1.0
        %v499 = vadd.f32 %v491, 1.0
        %v500 = vadd.f32 %v492, 1.0
        %v501 = vadd.f32 %v493, 1.0
        %v502 = vadd.f32 %v494, 1.0
        %v503 = vadd.f32 %v495, 1.0
        %v504 = vadd.f32 %v496, 1.0
        %v505 = vadd.f32 %v497, 1.0
        %v506 = vrcp.pop %v498
        %v507 = vrcp.pop %v499
        %v508 = vrcp.pop %v500
        %v509 = vrcp.pop %v501
        %v510 = vrcp.pop %v502
        %v511 = vrcp.pop %v503
        %v512 = vrcp.pop %v504
        %v513 = vrcp.pop %v505
        %v514 = vmul.f32 %v498, %v506
        %v515 = vmul.f32 %v499, %v507
        %v516 = vmul.f32 %v500, %v508
        %v517 = vmul.f32 %v501, %v509
        %v518 = vmul.f32 %v502, %v510
        %v519 = vmul.f32 %v503, %v511
        %v520 = vmul.f32 %v504, %v512
        %v521 = vmul.f32 %v505, %v513
        %v522 = vsub.f32 2.0, %v514
        %v523 = vsub.f32 2.0, %v515
        %v524 = vsub.f32 2.0, %v516
        %v525 = vsub.f32 2.0, %v517
        %v526 = vsub.f32 2.0, %v518
        %v527 = vsub.f32 2.0, %v519
        %v528 = vsub.f32 2.0, %v520
        %v529 = vsub.f32 2.0, %v521
        %v530 = vmul.f32 %v506, %v522
        %v531 = vmul.f32 %v507, %v523
        %v532 = vmul.f32 %v508, %v524
        %v533 = vmul.f32 %v509, %v525
        %v534 = vmul.f32 %v510, %v526
        %v535 = vmul.f32 %v511, %v527
        %v536 = vmul.f32 %v512, %v528
        %v537 = vmul.f32 %v513, %v529
        %v538 = vmul.f32 %v530, 1.0614054
        %v539 = vmul.f32 %v531, 1.0614054
        %v540 = vmul.f32 %v532, 1.0614054
        %v541 = vmul.f32 %v533, 1.0614054
        %v542 = vmul.f32 %v534, 1.0614054
        %v543 = vmul.f32 %v535, 1.0614054
        %v544 = vmul.f32 %v536, 1.0614054
        %v545 = vmul.f32 %v537, 1.0614054
        %v546 = vadd.f32 %v538, -1.4531521
        %v547 = vadd.f32 %v539, -1.4531521
        %v548 = vadd.f32 %v540, -1.4531521
        %v549 = vadd.f32 %v541, -1.4531521
        %v550 = vadd.f32 %v542, -1.4531521
        %v551 = vadd.f32 %v543, -1.4531521
        %v552 = vadd.f32 %v544, -1.4531521
        %v553 = vadd.f32 %v545, -1.4531521
        %v554 = vmul.f32 %v546, %v530
        %v555 = vmul.f32 %v547, %v531
        %v556 = vmul.f32 %v548, %v532
        %v557 = vmul.f32 %v549, %v533
        %v558 = vmul.f32 %v550, %v534
        %v559 = vmul.f32 %v551, %v535
        %v560 = vmul.f32 %v552, %v536
        %v561 = vmul.f32 %v553, %v537
        %v562 = vadd.f32 %v554, 1.4214138
        %v563 = vadd.f32 %v555, 1.4214138
        %v564 = vadd.f32 %v556, 1.4214138
        %v565 = vadd.f32 %v557, 1.4214138
        %v566 = vadd.f32 %v558, 1.4214138
        %v567 = vadd.f32 %v559, 1.4214138
        %v568 = vadd.f32 %v560, 1.4214138
        %v569 = vadd.f32 %v561, 1.4214138
        %v570 = vmul.f32 %v562, %v530
        %v571 = vmul.f32 %v563, %v531
        %v572 = vmul.f32 %v564, %v532
        %v573 = vmul.f32 %v565, %v533
        %v574 = vmul.f32 %v566, %v534
        %v575 = vmul.f32 %v567, %v535
        %v576 = vmul.f32 %v568, %v536
        %v577 = vmul.f32 %v569, %v537
        %v578 = vadd.f32 %v570, -0.28449672
        %v579 = vadd.f32 %v571, -0.28449672
        %v580 = vadd.f32 %v572, -0.28449672
        %v581 = vadd.f32 %v573, -0.28449672
        %v582 = vadd.f32 %v574, -0.28449672
        %v583 = vadd.f32 %v575, -0.28449672
        %v584 = vadd.f32 %v576, -0.28449672
        %v585 = vadd.f32 %v577, -0.28449672
        %v586 = vmul.f32 %v578, %v530
        %v587 = vmul.f32 %v579, %v531
        %v588 = vmul.f32 %v580, %v532
        %v589 = vmul.f32 %v581, %v533
        %v590 = vmul.f32 %v582, %v534
        %v591 = vmul.f32 %v583, %v535
        %v592 = vmul.f32 %v584, %v536
        %v593 = vmul.f32 %v585, %v537
        %v594 = vadd.f32 %v586, 0.2548296
        %v595 = vadd.f32 %v587, 0.2548296
        %v596 = vadd.f32 %v588, 0.2548296
        %v597 = vadd.f32 %v589, 0.2548296
        %v598 = vadd.f32 %v590, 0.2548296
        %v599 = vadd.f32 %v591, 0.2548296
        %v600 = vadd.f32 %v592, 0.2548296
        %v601 = vadd.f32 %v593, 0.2548296
        %v602 = vmul.f32 %v594, %v530
        %v603 = vmul.f32 %v595, %v531
        %v604 = vmul.f32 %v596, %v532
        %v605 = vmul.f32 %v597, %v533
        %v606 = vmul.f32 %v598, %v534
        %v607 = vmul.f32 %v599, %v535
        %v608 = vmul.f32 %v600, %v536
        %v609 = vmul.f32 %v601, %v537
        %v610 = vsub.f32 0.0, %v482
        %v611 = vsub.f32 0.0, %v483
        %v612 = vsub.f32 0.0, %v484
        %v613 = vsub.f32 0.0, %v485
        %v614 = vsub.f32 0.0, %v486
        %v615 = vsub.f32 0.0, %v487
        %v616 = vsub.f32 0.0, %v488
        %v617 = vsub.f32 0.0, %v489
        %v618 = vmul.f32 %v610, %v482
        %v619 = vmul.f32 %v611, %v483
        %v620 = vmul.f32 %v612, %v484
        %v621 = vmul.f32 %v613, %v485
        %v622 = vmul.f32 %v614, %v486
        %v623 = vmul.f32 %v615, %v487
        %v624 = vmul.f32 %v616, %v488
        %v625 = vmul.f32 %v617, %v489
        %v626 = vmul.f32 %v618, 1.442695
        %v627 = vpow.pop %v626
        %v628 = vmul.f32 %v619, 1.442695
        %v629 = vpow.pop %v628
        %v630 = vmul.f32 %v620, 1.442695
        %v631 = vpow.pop %v630
        %v632 = vmul.f32 %v621, 1.442695
        %v633 = vpow.pop %v632
        %v634 = vmul.f32 %v622, 1.442695
        %v635 = vpow.pop %v634
        %v636 = vmul.f32 %v623, 1.442695
        %v637 = vpow.pop %v636
        %v638 = vmul.f32 %v624, 1.442695
        %v639 = vpow.pop %v638
        %v640 = vmul.f32 %v625, 1.442695
        %v641 = vpow.pop %v640
        %v642 = vmul.f32 %v602, %v627
        %v643 = vmul.f32 %v603, %v629
        %v644 = vmul.f32 %v604, %v631
        %v645 = vmul.f32 %v605, %v633
        %v646 = vmul.f32 %v606, %v635
        %v647 = vmul.f32 %v607, %v637
        %v648 = vmul.f32 %v608, %v639
        %v649 = vmul.f32 %v609, %v641
        %v650 = vsub.f32 1.0, %v642
        %v651 = vsub.f32 1.0, %v643
        %v652 = vsub.f32 1.0, %v644
        %v653 = vsub.f32 1.0, %v645
        %v654 = vsub.f32 1.0, %v646
        %v655 = vsub.f32 1.0, %v647
        %v656 = vsub.f32 1.0, %v648
        %v657 = vsub.f32 1.0, %v649
        %v658 = vmul.f32 %v474, %v650
        %v659 = vmul.f32 %v475, %v651
        %v660 = vmul.f32 %v476, %v652
        %v661 = vmul.f32 %v477, %v653
        %v662 = vmul.f32 %v478, %v654
        %v663 = vmul.f32 %v479, %v655
        %v664 = vmul.f32 %v480, %v656
        %v665 = vmul.f32 %v481, %v657
        %v666 = vadd.f32 %v658, 1.0
        %v667 = vadd.f32 %v659, 1.0
        %v668 = vadd.f32 %v660, 1.0
        %v669 = vadd.f32 %v661, 1.0
        %v670 = vadd.f32 %v662, 1.0
        %v671 = vadd.f32 %v663, 1.0
        %v672 = vadd.f32 %v664, 1.0
        %v673 = vadd.f32 %v665, 1.0
        %v674 = vmul.f32 %v450, %v666
        %v675 = vmul.f32 %v451, %v667
        %v676 = vmul.f32 %v452, %v668
        %v677 = vmul.f32 %v453, %v669
        %v678 = vmul.f32 %v454, %v670
        %v679 = vmul.f32 %v455, %v671
        %v680 = vmul.f32 %v456, %v672
        %v681 = vmul.f32 %v457, %v673
        %v682 = vld [vmem:[%s251] sm:$0xff]
        %v683 = vld [vmem:[%s251 + $0x8] sm:$0xff]
        %v684 = vld [vmem:[%s251 + $0x10] sm:$0xff]
        %v685 = vld [vmem:[%s251 + $0x18] sm:$0xff]
        %v686 = vld [vmem:[%s251 + $0x20] sm:$0xff]
        %v687 = vld [vmem:[%s251 + $0x28] sm:$0xff]
        %v688 = vld [vmem:[%s251 + $0x30] sm:$0xff]
        %v689 = vld [vmem:[%s251 + $0x38] sm:$0xff]
        %v690 = vand.u32 %v682, 2147483647
        %v691 = vand.u32 %v683, 2147483647
        %v692 = vand.u32 %v684, 2147483647
        %v693 = vand.u32 %v685, 2147483647
        %v694 = vand.u32 %v686, 2147483647
        %v695 = vand.u32 %v687, 2147483647
        %v696 = vand.u32 %v688, 2147483647
        %v697 = vand.u32 %v689, 2147483647
        %vm698 = vcmp.ge.s32.totalorder %v690, 214748365
        %vm699 = vcmp.ge.s32.totalorder %v691, 214748365
        %vm700 = vcmp.ge.s32.totalorder %v692, 214748365
        %vm701 = vcmp.ge.s32.totalorder %v693, 214748365
        %vm702 = vcmp.ge.s32.totalorder %v694, 214748365
        %vm703 = vcmp.ge.s32.totalorder %v695, 214748365
        %vm704 = vcmp.ge.s32.totalorder %v696, 214748365
        %vm705 = vcmp.ge.s32.totalorder %v697, 214748365
        %v706 = vsel %vm698, %v674, 0.0
        %v707 = vsel %vm699, %v675, 0.0
        %v708 = vsel %vm700, %v676, 0.0
        %v709 = vsel %vm701, %v677, 0.0
        %v710 = vsel %vm702, %v678, 0.0
        %v711 = vsel %vm703, %v679, 0.0
        %v712 = vsel %vm704, %v680, 0.0
        %v713 = vsel %vm705, %v681, 0.0
        %714 = vst [vmem:[%s281] sm:$0xff] %v706
        %715 = vst [vmem:[%s281 + $0x8] sm:$0xff] %v707
        %716 = vst [vmem:[%s281 + $0x10] sm:$0xff] %v708
        %717 = vst [vmem:[%s281 + $0x18] sm:$0xff] %v709
        %718 = vst [vmem:[%s281 + $0x20] sm:$0xff] %v710
        %719 = vst [vmem:[%s281 + $0x28] sm:$0xff] %v711
        %720 = vst [vmem:[%s281 + $0x30] sm:$0xff] %v712
        %721 = vst [vmem:[%s281 + $0x38] sm:$0xff] %v713
        %s722 = sand.u32 %s144, 1
        %s723 = scalar_lea.sflag [#allocation4], %s722
        %s724 = sand.u32 %s144, 1
        %s725 = smul.addr %s724, 64
        %s726 = scalar_lea.vmem [#allocation7], %s725
        // Predicated region
        $region45: #{tpu_custom_call.1} parent=35 // pred_check
          %p727 = pneg %p154
        $region46: #{tpu_custom_call.1} parent=35 // pred_check_branch
          %729 = sbr.rel (%p727) target = $region48
        $region47: #{tpu_custom_call.1} parent=35 // pred_region
          %s730 = smul.u32 2, %s29
          %732 = vsyncadd %s723, 0
          %s733 = smul.addr %s28, 8
          %s734 = sadd.s32 %s730, %s733
          %s735 = smul.addr %s734, 8
          %s736 = scalar_lea.hbm %s4, %s735
          %s737 = sshll.u32 %s726, 4
          %s738 = int_to_ptr.vmem [resolvable:$true] %s737
          %s739 = sshll.u32 %s736, 4
          %s740 = int_to_ptr.hbm [resolvable:$true] %s739
          %745 = dma.vmem_to_hbm [thread:$0]  %s738, 1024, %s740, %s723, 256, 256, 16
        $region48: #{tpu_custom_call.1} parent=35 // pred_fallthru
          _
      $region36: #{tpu_custom_call.1} parent=5 // pred_fallthru
        _
      %p746 = scmp.le.s32.totalorder 2, %s19
      // Predicated region
      $region49: #{tpu_custom_call.1} parent=5 // pred_check
        %p747 = pneg %p746
      $region50: #{tpu_custom_call.1} parent=5 // pred_check_branch
        %749 = sbr.rel (%p747) target = $region52
      $region51: #{tpu_custom_call.1} parent=5 // pred_region
        %s750 = ssub.s32 %s19, 2
        // Predicated region
        $region53: #{tpu_custom_call.1} parent=51 // pred_check
          %p751 = pneg %p160
        $region54: #{tpu_custom_call.1} parent=51 // pred_check_branch
          %753 = sbr.rel (%p751) target = $region56
        $region55: #{tpu_custom_call.1} parent=51 // pred_region
          %s754 = sand.u32 %s145, 1
          %s755 = scalar_lea.sflag [#allocation4], %s754
          %s756 = sand.u32 %s145, 1
          %s757 = smul.addr %s756, 64
          %s758 = scalar_lea.vmem [#allocation7], %s757
          %760 = dma.done %s755, 1024
        $region56: #{tpu_custom_call.1} parent=51 // pred_fallthru
          _
      $region52: #{tpu_custom_call.1} parent=5 // pred_fallthru
        _
    $region6: #{tpu_custom_call.1} parent=1 // loop_footer
      %s23 = sadd.s32 1, %s19
    $region7: #{tpu_custom_call.1} parent=1 // loop_footer_branch
      %18 = sbr.rel target = $region3
    $region8: #{tpu_custom_call.1} parent=1 // loop_exit
      _
    %761 = vsyncpa [#allocation3], 1
    %s762 = scalar_lea.sflag [#allocation3], 1
    %763 = vsyncpa %s762, 1
    %764 = vsyncpa [#allocation6], 1
    %s765 = scalar_lea.sflag [#allocation6], 1
    %766 = vsyncpa %s765, 1
    %767 = vsyncpa [#allocation4], 1
    %s768 = scalar_lea.sflag [#allocation4], 1
    %769 = vsyncpa %s768, 1

</llo_original>
